<compile_context>
chip_gen: v6e
topology: v6e:2x2x1
jax: 0.10.0
libtpu: 0.0.40
codegen_flags: <defaults>
</compile_context>

<pallas_src>
import jax
import jax.numpy as jnp
from jax.experimental import pallas as pl
from jax.experimental.pallas import tpu as pltpu


# ----------------------------- Pallas kernel --------------------------------

def make_gconv_kernel(num_layers):
    """Fused GConv forward: all layers + BatchNorm + global_add_pool."""

    def kernel(*refs):
        # refs = [a, p, x, (w1, b1, w2, b2, gamma, beta) * L, z_out, g_out]
        a_ref, p_ref, x_ref = refs[0], refs[1], refs[2]
        layer_refs = refs[3:3 + 6 * num_layers]
        z_out_ref = refs[3 + 6 * num_layers]
        g_out_ref = refs[3 + 6 * num_layers + 1]

        a = a_ref[...]                       # bf16, self-loop (1+eps) folded in
        p = p_ref[...]                       # f32 one-hot pooling matrix [G, N]
        z = x_ref[...]                       # f32 node features [N, F]

        n = z.shape[0]
        inv_n = jnp.float32(1.0 / n)
        ones_row = jnp.ones((1, n), jnp.float32)   # MXU-based column reduction

        zs = []
        gs = []
        for l in range(num_layers):
            w1, b1, w2, b2, gamma, beta = (r[...] for r in layer_refs[6 * l:6 * (l + 1)])

            # GIN aggregation: A_hat @ z  (bf16 operands, f32 accumulation)
            agg = jnp.dot(a, z.astype(jnp.bfloat16),
                          preferred_element_type=jnp.float32)

            # MLP: Linear -> ReLU -> Linear
            h = jnp.dot(agg.astype(jnp.bfloat16), w1,
                        preferred_element_type=jnp.float32) + b1
            h = jnp.maximum(h, 0.0)
            h = jnp.dot(h.astype(jnp.bfloat16), w2,
                        preferred_element_type=jnp.float32) + b2

            # Module-level activation (ReLU)
            h = jnp.maximum(h, 0.0)

            # BatchNorm1d (training mode: batch stats, biased var, eps=1e-5)
            mean = jnp.dot(ones_row, h, preferred_element_type=jnp.float32) * inv_n
            d = h - mean
            var = jnp.dot(ones_row, d * d, preferred_element_type=jnp.float32) * inv_n
            hn = d * jax.lax.rsqrt(var + 1e-5) * gamma + beta

            # Fused global_add_pool on the activations already in VMEM
            # (P is an exact one-hot matrix; keep this dot in f32 so g matches
            #  the exact segment sum of the stored z values).
            gs.append(jnp.dot(p, hn, preferred_element_type=jnp.float32))
            zs.append(hn)
            z = hn

        # Single lane-dense store of the concatenated outputs.
        z_out_ref[...] = jnp.concatenate(zs, axis=1).astype(z_out_ref.dtype)
        g_out_ref[...] = jnp.concatenate(gs, axis=1).astype(g_out_ref.dtype)

    return kernel


# ------------------------------ Wrappers -------------------------------------

_VMEM_SPEC = pl.BlockSpec(memory_space=pltpu.MemorySpace.VMEM)


def init_params(key, input_dim, hidden_dim, num_layers):
    """Deterministic synthetic params (shapes match the PyTorch module).

    Weights are stored in bf16 (MXU operands); biases / BN affine stay f32.
    """
    params = []
    for i in range(num_layers):
        din = input_dim if i == 0 else hidden_dim
        key, k1, k2, k3, k4 = jax.random.split(key, 5)
        s1 = 1.0 / jnp.sqrt(jnp.float32(din))
        s2 = 1.0 / jnp.sqrt(jnp.float32(hidden_dim))
        params.append(dict(
            w1=jax.random.uniform(k1, (din, hidden_dim), jnp.float32, -s1, s1
                                  ).astype(jnp.bfloat16),
            b1=jax.random.uniform(k2, (1, hidden_dim), jnp.float32, -s1, s1),
            w2=jax.random.uniform(k3, (hidden_dim, hidden_dim), jnp.float32, -s2, s2
                                  ).astype(jnp.bfloat16),
            b2=jax.random.uniform(k4, (1, hidden_dim), jnp.float32, -s2, s2),
            gamma=jnp.ones((1, hidden_dim), jnp.float32),   # BatchNorm1d default
            beta=jnp.zeros((1, hidden_dim), jnp.float32),
        ))
    return params


def encoder_forward(x, edge_index, batch, params, num_graphs, eps=0.0):
    """Encoder.forward(x, edge_index, batch) -> (z, g) via one fused Pallas call."""
    N = x.shape[0]
    num_layers = len(params)
    hidden = params[0]["w1"].shape[1]
    src, dst = edge_index[0], edge_index[1]

    # Dense adjacency with the GIN self term folded in:
    # A_hat[i, j] = #edges j->i, A_hat[i, i] += (1 + eps).  Small integer
    # counts => exact in bf16.
    a = jnp.zeros((N, N), jnp.float32).at[dst, src].add(1.0)
    a = (a + (1.0 + eps) * jnp.eye(N, dtype=jnp.float32)).astype(jnp.bfloat16)

    # One-hot graph-assignment matrix for global_add_pool: P[g, n] = [batch[n]==g]
    p = jnp.zeros((num_graphs, N), jnp.float32).at[batch, jnp.arange(N)].add(1.0)

    flat_params = []
    for lp in params:
        flat_params += [lp["w1"], lp["b1"], lp["w2"], lp["b2"], lp["gamma"], lp["beta"]]

    z_cat, g_cat = pl.pallas_call(
        make_gconv_kernel(num_layers),
        out_shape=(
            jax.ShapeDtypeStruct((N, hidden * num_layers), jnp.float32),
            jax.ShapeDtypeStruct((num_graphs, hidden * num_layers), jnp.float32),
        ),
        in_specs=[_VMEM_SPEC] * (3 + 6 * num_layers),
        out_specs=(_VMEM_SPEC, _VMEM_SPEC),
        compiler_params=pltpu.CompilerParams(vmem_limit_bytes=64 << 20),
    )(a, p, x.astype(jnp.float32), *flat_params)

    return z_cat, g_cat


# --------------------------------- Main ---------------------------------------

if __name__ == "__main__":
    key = jax.random.PRNGKey(0)
    N, INPUT_DIM, HIDDEN, NUM_LAYERS, NUM_GRAPHS, E = 16, 8, 32, 2, 2, 40

    k_x, k_src, k_dst, k_params = jax.random.split(key, 4)
    x = jax.random.normal(k_x, (N, INPUT_DIM), jnp.float32)
    src = jax.random.randint(k_src, (E,), 0, N)
    dst = jax.random.randint(k_dst, (E,), 0, N)
    edge_index = jnp.stack([src, dst], axis=0)               # [2, E]
    batch = (jnp.arange(N) >= N // 2).astype(jnp.int32)      # 2 graphs of 8 nodes

    params = init_params(k_params, INPUT_DIM, HIDDEN, NUM_LAYERS)

    z_out, g_out = encoder_forward(x, edge_index, batch, params, NUM_GRAPHS)
    jax.block_until_ready((z_out, g_out))

    assert z_out.shape == (N, HIDDEN * NUM_LAYERS)
    assert g_out.shape == (NUM_GRAPHS, HIDDEN * NUM_LAYERS)
    print("KERNEL_OK")
</pallas_src>

<mosaic_0001>
module attributes {stable_mosaic.version = 11 : i64} {
  func.func @kernel(%arg0: memref<16x16xbf16, #tpu.memory_space<vmem>>, %arg1: memref<2x16xf32, #tpu.memory_space<vmem>>, %arg2: memref<16x8xf32, #tpu.memory_space<vmem>>, %arg3: memref<8x32xbf16, #tpu.memory_space<vmem>>, %arg4: memref<1x32xf32, #tpu.memory_space<vmem>>, %arg5: memref<32x32xbf16, #tpu.memory_space<vmem>>, %arg6: memref<1x32xf32, #tpu.memory_space<vmem>>, %arg7: memref<1x32xf32, #tpu.memory_space<vmem>>, %arg8: memref<1x32xf32, #tpu.memory_space<vmem>>, %arg9: memref<32x32xbf16, #tpu.memory_space<vmem>>, %arg10: memref<1x32xf32, #tpu.memory_space<vmem>>, %arg11: memref<32x32xbf16, #tpu.memory_space<vmem>>, %arg12: memref<1x32xf32, #tpu.memory_space<vmem>>, %arg13: memref<1x32xf32, #tpu.memory_space<vmem>>, %arg14: memref<1x32xf32, #tpu.memory_space<vmem>>, %arg15: memref<16x64xf32, #tpu.memory_space<vmem>>, %arg16: memref<2x64xf32, #tpu.memory_space<vmem>>) attributes {dimension_semantics = [], scalar_prefetch = 0 : i64, scratch_operands = 0 : i64, tpu.core_type = #tpu.core_type<tc>} {
    %c0 = arith.constant 0 : index
    %c0_0 = arith.constant 0 : index
    %0 = vector.load %arg0[%c0, %c0_0] : memref<16x16xbf16, #tpu.memory_space<vmem>>, vector<16x16xbf16>
    %c0_1 = arith.constant 0 : index
    %c0_2 = arith.constant 0 : index
    %1 = vector.load %arg1[%c0_1, %c0_2] : memref<2x16xf32, #tpu.memory_space<vmem>>, vector<2x16xf32>
    %c0_3 = arith.constant 0 : index
    %c0_4 = arith.constant 0 : index
    %2 = vector.load %arg2[%c0_3, %c0_4] : memref<16x8xf32, #tpu.memory_space<vmem>>, vector<16x8xf32>
    %cst = arith.constant 1.000000e+00 : f32
    %3 = vector.broadcast %cst : f32 to vector<1x16xf32>
    %c0_5 = arith.constant 0 : index
    %c0_6 = arith.constant 0 : index
    %4 = vector.load %arg3[%c0_5, %c0_6] : memref<8x32xbf16, #tpu.memory_space<vmem>>, vector<8x32xbf16>
    %c0_7 = arith.constant 0 : index
    %c0_8 = arith.constant 0 : index
    %5 = vector.load %arg4[%c0_7, %c0_8] : memref<1x32xf32, #tpu.memory_space<vmem>>, vector<1x32xf32>
    %c0_9 = arith.constant 0 : index
    %c0_10 = arith.constant 0 : index
    %6 = vector.load %arg5[%c0_9, %c0_10] : memref<32x32xbf16, #tpu.memory_space<vmem>>, vector<32x32xbf16>
    %c0_11 = arith.constant 0 : index
    %c0_12 = arith.constant 0 : index
    %7 = vector.load %arg6[%c0_11, %c0_12] : memref<1x32xf32, #tpu.memory_space<vmem>>, vector<1x32xf32>
    %c0_13 = arith.constant 0 : index
    %c0_14 = arith.constant 0 : index
    %8 = vector.load %arg7[%c0_13, %c0_14] : memref<1x32xf32, #tpu.memory_space<vmem>>, vector<1x32xf32>
    %c0_15 = arith.constant 0 : index
    %c0_16 = arith.constant 0 : index
    %9 = vector.load %arg8[%c0_15, %c0_16] : memref<1x32xf32, #tpu.memory_space<vmem>>, vector<1x32xf32>
    %10 = arith.truncf %2 : vector<16x8xf32> to vector<16x8xbf16>
    %cst_17 = arith.constant dense<0.000000e+00> : vector<16x8xf32>
    %11 = tpu.matmul %0, %10, %cst_17 {dimension_numbers = #tpu.dot_dimension_numbers<[1], [0], [0], [1], [0, 0, 1, 1], [], []>} : vector<16x16xbf16>, vector<16x8xbf16>, vector<16x8xf32> -> vector<16x8xf32>
    %12 = arith.truncf %11 : vector<16x8xf32> to vector<16x8xbf16>
    %cst_18 = arith.constant dense<0.000000e+00> : vector<16x32xf32>
    %13 = tpu.matmul %12, %4, %cst_18 {dimension_numbers = #tpu.dot_dimension_numbers<[1], [0], [0], [1], [0, 0, 1, 1], [], []>} : vector<16x8xbf16>, vector<8x32xbf16>, vector<16x32xf32> -> vector<16x32xf32>
    %14 = vector.broadcast %5 : vector<1x32xf32> to vector<16x32xf32>
    %15 = arith.addf %13, %14 : vector<16x32xf32>
    %cst_19 = arith.constant 0.000000e+00 : f32
    %16 = vector.broadcast %cst_19 : f32 to vector<16x32xf32>
    %17 = arith.maximumf %15, %16 : vector<16x32xf32>
    %18 = arith.truncf %17 : vector<16x32xf32> to vector<16x32xbf16>
    %cst_20 = arith.constant dense<0.000000e+00> : vector<16x32xf32>
    %19 = tpu.matmul %18, %6, %cst_20 {dimension_numbers = #tpu.dot_dimension_numbers<[1], [0], [0], [1], [0, 0, 1, 1], [], []>} : vector<16x32xbf16>, vector<32x32xbf16>, vector<16x32xf32> -> vector<16x32xf32>
    %20 = vector.broadcast %7 : vector<1x32xf32> to vector<16x32xf32>
    %21 = arith.addf %19, %20 : vector<16x32xf32>
    %cst_21 = arith.constant 0.000000e+00 : f32
    %22 = vector.broadcast %cst_21 : f32 to vector<16x32xf32>
    %23 = arith.maximumf %21, %22 : vector<16x32xf32>
    %cst_22 = arith.constant dense<0.000000e+00> : vector<1x32xf32>
    %24 = tpu.matmul %3, %23, %cst_22 {dimension_numbers = #tpu.dot_dimension_numbers<[1], [0], [0], [1], [0, 0, 1, 1], [], []>} : vector<1x16xf32>, vector<16x32xf32>, vector<1x32xf32> -> vector<1x32xf32>
    %cst_23 = arith.constant 6.250000e-02 : f32
    %25 = vector.broadcast %cst_23 : f32 to vector<1x32xf32>
    %26 = arith.mulf %24, %25 : vector<1x32xf32>
    %27 = vector.broadcast %26 : vector<1x32xf32> to vector<16x32xf32>
    %28 = arith.subf %23, %27 : vector<16x32xf32>
    %29 = arith.mulf %28, %28 : vector<16x32xf32>
    %cst_24 = arith.constant dense<0.000000e+00> : vector<1x32xf32>
    %30 = tpu.matmul %3, %29, %cst_24 {dimension_numbers = #tpu.dot_dimension_numbers<[1], [0], [0], [1], [0, 0, 1, 1], [], []>} : vector<1x16xf32>, vector<16x32xf32>, vector<1x32xf32> -> vector<1x32xf32>
    %cst_25 = arith.constant 6.250000e-02 : f32
    %31 = vector.broadcast %cst_25 : f32 to vector<1x32xf32>
    %32 = arith.mulf %30, %31 : vector<1x32xf32>
    %cst_26 = arith.constant 9.99999974E-6 : f32
    %33 = vector.broadcast %cst_26 : f32 to vector<1x32xf32>
    %34 = arith.addf %32, %33 : vector<1x32xf32>
    %35 = math.rsqrt %34 : vector<1x32xf32>
    %36 = vector.broadcast %35 : vector<1x32xf32> to vector<16x32xf32>
    %37 = arith.mulf %28, %36 : vector<16x32xf32>
    %38 = vector.broadcast %8 : vector<1x32xf32> to vector<16x32xf32>
    %39 = arith.mulf %37, %38 : vector<16x32xf32>
    %40 = vector.broadcast %9 : vector<1x32xf32> to vector<16x32xf32>
    %41 = arith.addf %39, %40 : vector<16x32xf32>
    %cst_27 = arith.constant dense<0.000000e+00> : vector<2x32xf32>
    %42 = tpu.matmul %1, %41, %cst_27 {dimension_numbers = #tpu.dot_dimension_numbers<[1], [0], [0], [1], [0, 0, 1, 1], [], []>} : vector<2x16xf32>, vector<16x32xf32>, vector<2x32xf32> -> vector<2x32xf32>
    %c0_28 = arith.constant 0 : index
    %c0_29 = arith.constant 0 : index
    %43 = vector.load %arg9[%c0_28, %c0_29] : memref<32x32xbf16, #tpu.memory_space<vmem>>, vector<32x32xbf16>
    %c0_30 = arith.constant 0 : index
    %c0_31 = arith.constant 0 : index
    %44 = vector.load %arg10[%c0_30, %c0_31] : memref<1x32xf32, #tpu.memory_space<vmem>>, vector<1x32xf32>
    %c0_32 = arith.constant 0 : index
    %c0_33 = arith.constant 0 : index
    %45 = vector.load %arg11[%c0_32, %c0_33] : memref<32x32xbf16, #tpu.memory_space<vmem>>, vector<32x32xbf16>
    %c0_34 = arith.constant 0 : index
    %c0_35 = arith.constant 0 : index
    %46 = vector.load %arg12[%c0_34, %c0_35] : memref<1x32xf32, #tpu.memory_space<vmem>>, vector<1x32xf32>
    %c0_36 = arith.constant 0 : index
    %c0_37 = arith.constant 0 : index
    %47 = vector.load %arg13[%c0_36, %c0_37] : memref<1x32xf32, #tpu.memory_space<vmem>>, vector<1x32xf32>
    %c0_38 = arith.constant 0 : index
    %c0_39 = arith.constant 0 : index
    %48 = vector.load %arg14[%c0_38, %c0_39] : memref<1x32xf32, #tpu.memory_space<vmem>>, vector<1x32xf32>
    %49 = arith.truncf %41 : vector<16x32xf32> to vector<16x32xbf16>
    %cst_40 = arith.constant dense<0.000000e+00> : vector<16x32xf32>
    %50 = tpu.matmul %0, %49, %cst_40 {dimension_numbers = #tpu.dot_dimension_numbers<[1], [0], [0], [1], [0, 0, 1, 1], [], []>} : vector<16x16xbf16>, vector<16x32xbf16>, vector<16x32xf32> -> vector<16x32xf32>
    %51 = arith.truncf %50 : vector<16x32xf32> to vector<16x32xbf16>
    %cst_41 = arith.constant dense<0.000000e+00> : vector<16x32xf32>
    %52 = tpu.matmul %51, %43, %cst_41 {dimension_numbers = #tpu.dot_dimension_numbers<[1], [0], [0], [1], [0, 0, 1, 1], [], []>} : vector<16x32xbf16>, vector<32x32xbf16>, vector<16x32xf32> -> vector<16x32xf32>
    %53 = vector.broadcast %44 : vector<1x32xf32> to vector<16x32xf32>
    %54 = arith.addf %52, %53 : vector<16x32xf32>
    %cst_42 = arith.constant 0.000000e+00 : f32
    %55 = vector.broadcast %cst_42 : f32 to vector<16x32xf32>
    %56 = arith.maximumf %54, %55 : vector<16x32xf32>
    %57 = arith.truncf %56 : vector<16x32xf32> to vector<16x32xbf16>
    %cst_43 = arith.constant dense<0.000000e+00> : vector<16x32xf32>
    %58 = tpu.matmul %57, %45, %cst_43 {dimension_numbers = #tpu.dot_dimension_numbers<[1], [0], [0], [1], [0, 0, 1, 1], [], []>} : vector<16x32xbf16>, vector<32x32xbf16>, vector<16x32xf32> -> vector<16x32xf32>
    %59 = vector.broadcast %46 : vector<1x32xf32> to vector<16x32xf32>
    %60 = arith.addf %58, %59 : vector<16x32xf32>
    %cst_44 = arith.constant 0.000000e+00 : f32
    %61 = vector.broadcast %cst_44 : f32 to vector<16x32xf32>
    %62 = arith.maximumf %60, %61 : vector<16x32xf32>
    %cst_45 = arith.constant dense<0.000000e+00> : vector<1x32xf32>
    %63 = tpu.matmul %3, %62, %cst_45 {dimension_numbers = #tpu.dot_dimension_numbers<[1], [0], [0], [1], [0, 0, 1, 1], [], []>} : vector<1x16xf32>, vector<16x32xf32>, vector<1x32xf32> -> vector<1x32xf32>
    %cst_46 = arith.constant 6.250000e-02 : f32
    %64 = vector.broadcast %cst_46 : f32 to vector<1x32xf32>
    %65 = arith.mulf %63, %64 : vector<1x32xf32>
    %66 = vector.broadcast %65 : vector<1x32xf32> to vector<16x32xf32>
    %67 = arith.subf %62, %66 : vector<16x32xf32>
    %68 = arith.mulf %67, %67 : vector<16x32xf32>
    %cst_47 = arith.constant dense<0.000000e+00> : vector<1x32xf32>
    %69 = tpu.matmul %3, %68, %cst_47 {dimension_numbers = #tpu.dot_dimension_numbers<[1], [0], [0], [1], [0, 0, 1, 1], [], []>} : vector<1x16xf32>, vector<16x32xf32>, vector<1x32xf32> -> vector<1x32xf32>
    %cst_48 = arith.constant 6.250000e-02 : f32
    %70 = vector.broadcast %cst_48 : f32 to vector<1x32xf32>
    %71 = arith.mulf %69, %70 : vector<1x32xf32>
    %cst_49 = arith.constant 9.99999974E-6 : f32
    %72 = vector.broadcast %cst_49 : f32 to vector<1x32xf32>
    %73 = arith.addf %71, %72 : vector<1x32xf32>
    %74 = math.rsqrt %73 : vector<1x32xf32>
    %75 = vector.broadcast %74 : vector<1x32xf32> to vector<16x32xf32>
    %76 = arith.mulf %67, %75 : vector<16x32xf32>
    %77 = vector.broadcast %47 : vector<1x32xf32> to vector<16x32xf32>
    %78 = arith.mulf %76, %77 : vector<16x32xf32>
    %79 = vector.broadcast %48 : vector<1x32xf32> to vector<16x32xf32>
    %80 = arith.addf %78, %79 : vector<16x32xf32>
    %cst_50 = arith.constant dense<0.000000e+00> : vector<2x32xf32>
    %81 = tpu.matmul %1, %80, %cst_50 {dimension_numbers = #tpu.dot_dimension_numbers<[1], [0], [0], [1], [0, 0, 1, 1], [], []>} : vector<2x16xf32>, vector<16x32xf32>, vector<2x32xf32> -> vector<2x32xf32>
    %82 = tpu.concatenate %41, %80 in 1 : vector<16x32xf32>, vector<16x32xf32> -> vector<16x64xf32>
    %c0_51 = arith.constant 0 : index
    %c0_52 = arith.constant 0 : index
    %83 = vector.load %arg15[%c0_51, %c0_52] : memref<16x64xf32, #tpu.memory_space<vmem>>, vector<16x64xf32>
    tpu.vector_store %arg15[%c0_51, %c0_52], %82 {strides = array<i32>} : memref<16x64xf32, #tpu.memory_space<vmem>>, vector<16x64xf32>,
    %84 = tpu.concatenate %42, %81 in 1 : vector<2x32xf32>, vector<2x32xf32> -> vector<2x64xf32>
    %c0_53 = arith.constant 0 : index
    %c0_54 = arith.constant 0 : index
    %85 = vector.load %arg16[%c0_53, %c0_54] : memref<2x64xf32, #tpu.memory_space<vmem>>, vector<2x64xf32>
    tpu.vector_store %arg16[%c0_53, %c0_54], %84 {strides = array<i32>} : memref<2x64xf32, #tpu.memory_space<vmem>>, vector<2x64xf32>,
    return
  }
}

</mosaic_0001>

<llo_original>
// kernel: tpu_custom_call.1
$region0: #{tpu_custom_call.1}
  #allocation0 [shape = 'u32[]', space=smem, size = 0x4, offset = 0x4, fixed_abs, tag = 'smem constant byte address 0x4 - core index']
  #allocation1 [shape = 'u32[144,128]{1,0:T(1,128)}', space=vmem, size = 0x12000, scoped, tag = 'internal scratch']
  %s0 = inlined_call_operand.hbm [shape: bf16[16,16], index: 0, kind: input, shape index: {}]
  %s1 = inlined_call_operand.hbm [shape: f32[2,16], index: 1, kind: input, shape index: {}]
  %s2 = inlined_call_operand.vmem [shape: f32[16,8], index: 2, kind: input, shape index: {}]
  %s3 = inlined_call_operand.hbm [shape: bf16[8,32], index: 3, kind: input, shape index: {}]
  %s4 = inlined_call_operand.vmem [shape: f32[1,32], index: 4, kind: input, shape index: {}]
  %s5 = inlined_call_operand.vmem [shape: bf16[32,32], index: 5, kind: input, shape index: {}]
  %s6 = inlined_call_operand.vmem [shape: f32[1,32], index: 6, kind: input, shape index: {}]
  %s7 = inlined_call_operand.vmem [shape: f32[1,32], index: 7, kind: input, shape index: {}]
  %s8 = inlined_call_operand.vmem [shape: f32[1,32], index: 8, kind: input, shape index: {}]
  %s9 = inlined_call_operand.vmem [shape: bf16[32,32], index: 9, kind: input, shape index: {}]
  %s10 = inlined_call_operand.vmem [shape: f32[1,32], index: 10, kind: input, shape index: {}]
  %s11 = inlined_call_operand.hbm [shape: bf16[32,32], index: 11, kind: input, shape index: {}]
  %s12 = inlined_call_operand.vmem [shape: f32[1,32], index: 12, kind: input, shape index: {}]
  %s13 = inlined_call_operand.vmem [shape: f32[1,32], index: 13, kind: input, shape index: {}]
  %s14 = inlined_call_operand.vmem [shape: f32[1,32], index: 14, kind: input, shape index: {}]
  %s15 = inlined_call_operand.hbm [shape: f32[16,64], index: 15, kind: output, shape index: {0}]
  %s16 = inlined_call_operand.hbm [shape: f32[2,64], index: 16, kind: output, shape index: {1}]
  %17 = xla_tuple %s15, %s16
  %s18 = sld [smem:[#allocation0]]
  $region94: #{tpu_custom_call.1} parent=0
    _
  %s20 = ssub.s32 1, %s18
  %s21 = scalar_select 0, %s20, %s18
  $region1: #{tpu_custom_call.1} parent=0
    #allocation2 [shape = 'u8[4096]{0}', space=vmem, size = 0x1000, scoped, tag = 'input window, operand 0, single buffered']
    #allocation3 [shape = 's32[1]{0}', space=sflag, size = 0x4, scoped, tag = 'scoped memory for tpu_custom_call.1']
    #allocation4 [shape = 's32[1]{0}', space=sflag, size = 0x4, scoped, tag = 'scoped memory for tpu_custom_call.1']
    #allocation5 [shape = 'u8[1024]{0}', space=vmem, size = 0x400, scoped, tag = 'input window, operand 1, single buffered']
    #allocation6 [shape = 's32[1]{0}', space=sflag, size = 0x4, scoped, tag = 'scoped memory for tpu_custom_call.1']
    #allocation7 [shape = 'u8[2048]{0}', space=vmem, size = 0x800, scoped, tag = 'input window, operand 3, single buffered']
    #allocation8 [shape = 'u8[8192]{0}', space=vmem, size = 0x2000, scoped, tag = 'input window, operand 11, single buffered']
    #allocation9 [shape = 's32[1]{0}', space=sflag, size = 0x4, scoped, tag = 'scoped memory for tpu_custom_call.1']
    #allocation10 [shape = 'u8[8192]{0}', space=vmem, size = 0x2000, scoped, tag = 'output window, operand 0, single buffered']
    #allocation11 [shape = 'u8[1024]{0}', space=vmem, size = 0x400, scoped, tag = 'output window, operand 1, single buffered']
    #allocation12 [shape = 's32[1]{0}', space=sflag, size = 0x4, scoped, tag = 'scoped memory for tpu_custom_call.1']
    %22 = vsyncpa [#allocation3], 0
    %23 = vsyncpa [#allocation6], 0
    %24 = vsyncpa [#allocation9], 0
    %25 = vsyncpa [#allocation4], 0
    %26 = vsyncpa [#allocation12], 0
    // Predicated region
    $region2: #{tpu_custom_call.1} parent=1 // pred_check
      _
    $region3: #{tpu_custom_call.1} parent=1 // pred_check_branch
      %28 = sbr.rel (0) target = $region5
    $region4: #{tpu_custom_call.1} parent=1 // pred_region
      %s30 = ssub.s32 128, 128
      %31 = vsyncadd [#allocation3], %s30
      %s32 = sshll.u32 [#allocation2], 4
      %s33 = int_to_ptr.vmem [resolvable:$true] %s32
      %38 = dma.hbm_to_vmem [thread:$0]  %s0, 128, %s33, [#allocation3], 64, 64, 4
    $region5: #{tpu_custom_call.1} parent=1 // pred_fallthru
      _
    // Predicated region
    $region6: #{tpu_custom_call.1} parent=1 // pred_check
      _
    $region7: #{tpu_custom_call.1} parent=1 // pred_check_branch
      %40 = sbr.rel (0) target = $region9
    $region8: #{tpu_custom_call.1} parent=1 // pred_region
      %s42 = ssub.s32 32, 32
      %43 = vsyncadd [#allocation6], %s42
      %s45 = sshll.u32 [#allocation5], 4
      %s46 = int_to_ptr.vmem [resolvable:$true] %s45
      %48 = dma.hbm_to_vmem [thread:$0]  %s1, 32, %s46, [#allocation6]
    $region9: #{tpu_custom_call.1} parent=1 // pred_fallthru
      _
    // Predicated region
    $region10: #{tpu_custom_call.1} parent=1 // pred_check
      _
    $region11: #{tpu_custom_call.1} parent=1 // pred_check_branch
      %50 = sbr.rel (0) target = $region13
    $region12: #{tpu_custom_call.1} parent=1 // pred_region
      _
    $region13: #{tpu_custom_call.1} parent=1 // pred_fallthru
      _
    // Predicated region
    $region14: #{tpu_custom_call.1} parent=1 // pred_check
      _
    $region15: #{tpu_custom_call.1} parent=1 // pred_check_branch
      %52 = sbr.rel (0) target = $region17
    $region16: #{tpu_custom_call.1} parent=1 // pred_region
      %s54 = ssub.s32 64, 64
      %55 = vsyncadd [#allocation6], %s54
      %s57 = sshll.u32 [#allocation7], 4
      %s58 = int_to_ptr.vmem [resolvable:$true] %s57
      %60 = dma.hbm_to_vmem [thread:$0]  %s3, 64, %s58, [#allocation6]
    $region17: #{tpu_custom_call.1} parent=1 // pred_fallthru
      _
    // Predicated region
    $region18: #{tpu_custom_call.1} parent=1 // pred_check
      _
    $region19: #{tpu_custom_call.1} parent=1 // pred_check_branch
      %62 = sbr.rel (0) target = $region21
    $region20: #{tpu_custom_call.1} parent=1 // pred_region
      _
    $region21: #{tpu_custom_call.1} parent=1 // pred_fallthru
      _
    // Predicated region
    $region22: #{tpu_custom_call.1} parent=1 // pred_check
      _
    $region23: #{tpu_custom_call.1} parent=1 // pred_check_branch
      %64 = sbr.rel (0) target = $region25
    $region24: #{tpu_custom_call.1} parent=1 // pred_region
      _
    $region25: #{tpu_custom_call.1} parent=1 // pred_fallthru
      _
    // Predicated region
    $region26: #{tpu_custom_call.1} parent=1 // pred_check
      _
    $region27: #{tpu_custom_call.1} parent=1 // pred_check_branch
      %66 = sbr.rel (0) target = $region29
    $region28: #{tpu_custom_call.1} parent=1 // pred_region
      _
    $region29: #{tpu_custom_call.1} parent=1 // pred_fallthru
      _
    // Predicated region
    $region30: #{tpu_custom_call.1} parent=1 // pred_check
      _
    $region31: #{tpu_custom_call.1} parent=1 // pred_check_branch
      %68 = sbr.rel (0) target = $region33
    $region32: #{tpu_custom_call.1} parent=1 // pred_region
      _
    $region33: #{tpu_custom_call.1} parent=1 // pred_fallthru
      _
    // Predicated region
    $region34: #{tpu_custom_call.1} parent=1 // pred_check
      _
    $region35: #{tpu_custom_call.1} parent=1 // pred_check_branch
      %70 = sbr.rel (0) target = $region37
    $region36: #{tpu_custom_call.1} parent=1 // pred_region
      _
    $region37: #{tpu_custom_call.1} parent=1 // pred_fallthru
      _
    // Predicated region
    $region38: #{tpu_custom_call.1} parent=1 // pred_check
      _
    $region39: #{tpu_custom_call.1} parent=1 // pred_check_branch
      %72 = sbr.rel (0) target = $region41
    $region40: #{tpu_custom_call.1} parent=1 // pred_region
      _
    $region41: #{tpu_custom_call.1} parent=1 // pred_fallthru
      _
    // Predicated region
    $region42: #{tpu_custom_call.1} parent=1 // pred_check
      _
    $region43: #{tpu_custom_call.1} parent=1 // pred_check_branch
      %74 = sbr.rel (0) target = $region45
    $region44: #{tpu_custom_call.1} parent=1 // pred_region
      _
    $region45: #{tpu_custom_call.1} parent=1 // pred_fallthru
      _
    // Predicated region
    $region46: #{tpu_custom_call.1} parent=1 // pred_check
      _
    $region47: #{tpu_custom_call.1} parent=1 // pred_check_branch
      %76 = sbr.rel (0) target = $region49
    $region48: #{tpu_custom_call.1} parent=1 // pred_region
      %s78 = ssub.s32 256, 256
      %79 = vsyncadd [#allocation9], %s78
      %s80 = sshll.u32 [#allocation8], 4
      %s81 = int_to_ptr.vmem [resolvable:$true] %s80
      %86 = dma.hbm_to_vmem [thread:$0]  %s11, 256, %s81, [#allocation9], 64, 64, 4
    $region49: #{tpu_custom_call.1} parent=1 // pred_fallthru
      _
    // Predicated region
    $region50: #{tpu_custom_call.1} parent=1 // pred_check
      _
    $region51: #{tpu_custom_call.1} parent=1 // pred_check_branch
      %88 = sbr.rel (0) target = $region53
    $region52: #{tpu_custom_call.1} parent=1 // pred_region
      _
    $region53: #{tpu_custom_call.1} parent=1 // pred_fallthru
      _
    // Predicated region
    $region54: #{tpu_custom_call.1} parent=1 // pred_check
      _
    $region55: #{tpu_custom_call.1} parent=1 // pred_check_branch
      %90 = sbr.rel (0) target = $region57
    $region56: #{tpu_custom_call.1} parent=1 // pred_region
      _
    $region57: #{tpu_custom_call.1} parent=1 // pred_fallthru
      _
    // Predicated region
    $region58: #{tpu_custom_call.1} parent=1 // pred_check
      _
    $region59: #{tpu_custom_call.1} parent=1 // pred_check_branch
      %92 = sbr.rel (0) target = $region61
    $region60: #{tpu_custom_call.1} parent=1 // pred_region
      _
    $region61: #{tpu_custom_call.1} parent=1 // pred_fallthru
      _
    // Predicated region
    $region62: #{tpu_custom_call.1} parent=1 // pred_check
      _
    $region63: #{tpu_custom_call.1} parent=1 // pred_check_branch
      %94 = sbr.rel (0) target = $region65
    $region64: #{tpu_custom_call.1} parent=1 // pred_region
      %95 = dma.done [#allocation3], 128
    $region65: #{tpu_custom_call.1} parent=1 // pred_fallthru
      _
    // Predicated region
    $region66: #{tpu_custom_call.1} parent=1 // pred_check
      _
    $region67: #{tpu_custom_call.1} parent=1 // pred_check_branch
      %97 = sbr.rel (0) target = $region69
    $region68: #{tpu_custom_call.1} parent=1 // pred_region
      %98 = dma.done [#allocation6], 32
    $region69: #{tpu_custom_call.1} parent=1 // pred_fallthru
      _
    // Predicated region
    $region70: #{tpu_custom_call.1} parent=1 // pred_check
      _
    $region71: #{tpu_custom_call.1} parent=1 // pred_check_branch
      %100 = sbr.rel (0) target = $region73
    $region72: #{tpu_custom_call.1} parent=1 // pred_region
      %101 = dma.done [#allocation6], 64
    $region73: #{tpu_custom_call.1} parent=1 // pred_fallthru
      _
    // Predicated region
    $region74: #{tpu_custom_call.1} parent=1 // pred_check
      _
    $region75: #{tpu_custom_call.1} parent=1 // pred_check_branch
      %103 = sbr.rel (0) target = $region77
    $region76: #{tpu_custom_call.1} parent=1 // pred_region
      %104 = dma.done [#allocation9], 256
    $region77: #{tpu_custom_call.1} parent=1 // pred_fallthru
      _
    %v106 = vld [vmem:[#allocation2] sm:$0xf]
    %v107 = vld [vmem:[#allocation2 + $0x4] sm:$0xf]
    %v108 = vld [vmem:[#allocation5] sm:$0x3]
    %v109 = vld [vmem:[%s2] sm:$0xff]
    %v110 = vld [vmem:[%s2 + $0x8] sm:$0xff]
    %v111 = vld [vmem:[#allocation7] sm:$0xf]
    %v112 = vld [vmem:[%s4] sm:$0x1]
    %v113 = vld [vmem:[%s5] sm:$0xf]
    %v114 = vld [vmem:[%s5 + $0x4] sm:$0xf]
    %v115 = vld [vmem:[%s5 + $0x8] sm:$0xf]
    %v116 = vld [vmem:[%s5 + $0xc] sm:$0xf]
    %v117 = vld [vmem:[%s6] sm:$0x1]
    %v118 = vld [vmem:[%s7] sm:$0x1]
    %v119 = vld [vmem:[%s8] sm:$0x1]
    %v120 = vpack.c.bf16 %v110, %v109
    %v123 = vunpack.c.l.b16 %v106
    %v124 = vunpack.c.l.b16 %v107
    %v125 = vpack.c.b16 %v124, %v123
    %vm126 = vcmask 130048
    %v128 = vsel %vm126, %v125, 0
    %130 = vmatprep.subr.bf16.mxu0 0
    %131 = vmatpush1.bf16.msra.mxu0 0
    %132 = vmatprep.subr.bf16.mxu0 0
    %133 = vmatpush1.bf16.msra.mxu0 0
    %134 = vmatprep.subr.bf16.mxu0 0
    %135 = vmatpush1.bf16.msra.mxu0 0
    %136 = vmatprep.subr.bf16.mxu0 0
    %137 = vmatpush1.bf16.msra.mxu0 0
    %138 = vmatprep.subr.bf16.mxu0 0
    %139 = vmatpush1.bf16.msra.mxu0 0
    %140 = vmatprep.subr.bf16.mxu0 0
    %141 = vmatpush1.bf16.msra.mxu0 0
    %142 = vmatprep.subr.bf16.mxu0 0
    %143 = vmatpush1.bf16.msra.mxu0 0
    %144 = vmatprep.subr.bf16.mxu0 0
    %145 = vmatpush1.bf16.msra.mxu0 %v120
    %146 = vmatprep.subr.bf16.mxu0 0
    %147 = vmatpush2.bf16.msra.mxu0 0
    %148 = vmatprep.subr.bf16.mxu0 0
    %149 = vmatpush2.bf16.msra.mxu0 0
    %150 = vmatprep.subr.bf16.mxu0 0
    %151 = vmatpush2.bf16.msra.mxu0 0
    %152 = vmatprep.subr.bf16.mxu0 0
    %153 = vmatpush2.bf16.msra.mxu0 0
    %154 = vmatprep.subr.bf16.mxu0 0
    %155 = vmatpush2.bf16.msra.mxu0 0
    %156 = vmatprep.subr.bf16.mxu0 0
    %157 = vmatpush2.bf16.msra.mxu0 0
    %158 = vmatprep.subr.bf16.mxu0 0
    %159 = vmatpush2.bf16.msra.mxu0 0
    %160 = vmatprep.subr.bf16.mxu0 0
    %161 = vmatpush2.bf16.msra.mxu0 0
    %162 = vmatprep.mubr.bf16.mxu0 0
    %163 = vmatmul.mubr.bf16.gmra.mxu0 %v128
    %v164 = vpop.f32.mrf.mxu0
    %v165 = vadd.f32 0.0, %v164
    %v166 = vpop.f32.mrf.mxu0
    %v167 = vpop.f32.mrf.mxu0
    %v168 = vadd.f32 0.0, %v167
    %v169 = vpop.f32.mrf.mxu0
    %170 = vdwg.mxu0
    %v171 = vpack.c.bf16 %v168, %v165
    %v173 = vlaneseq
    %v174 = vshrl.u32 %v173, 7
    %v175 = vsub.s32 0, %v174
    %v176 = vrot.slane %v112, %v175
    %vm178 = vcmask 64512
    %v180 = vsel %vm178, %v171, 0
    %vm182 = vcmask 1043456
    %v184 = vsel %vm182, %v111, 0
    %186 = vmatprep.subr.bf16.mxu0 0
    %187 = vmatpush1.bf16.msra.mxu0 0
    %188 = vmatprep.subr.bf16.mxu0 0
    %189 = vmatpush1.bf16.msra.mxu0 0
    %190 = vmatprep.subr.bf16.mxu0 0
    %191 = vmatpush1.bf16.msra.mxu0 0
    %192 = vmatprep.subr.bf16.mxu0 0
    %193 = vmatpush1.bf16.msra.mxu0 0
    %194 = vmatprep.subr.bf16.mxu0 0
    %195 = vmatpush1.bf16.msra.mxu0 0
    %196 = vmatprep.subr.bf16.mxu0 0
    %197 = vmatpush1.bf16.msra.mxu0 0
    %198 = vmatprep.subr.bf16.mxu0 0
    %199 = vmatpush1.bf16.msra.mxu0 0
    %200 = vmatprep.subr.bf16.mxu0 0
    %201 = vmatpush1.bf16.msra.mxu0 %v184
    %202 = vmatprep.subr.bf16.mxu0 0
    %203 = vmatpush2.bf16.msra.mxu0 0
    %204 = vmatprep.subr.bf16.mxu0 0
    %205 = vmatpush2.bf16.msra.mxu0 0
    %206 = vmatprep.subr.bf16.mxu0 0
    %207 = vmatpush2.bf16.msra.mxu0 0
    %208 = vmatprep.subr.bf16.mxu0 0
    %209 = vmatpush2.bf16.msra.mxu0 0
    %210 = vmatprep.subr.bf16.mxu0 0
    %211 = vmatpush2.bf16.msra.mxu0 0
    %212 = vmatprep.subr.bf16.mxu0 0
    %213 = vmatpush2.bf16.msra.mxu0 0
    %214 = vmatprep.subr.bf16.mxu0 0
    %215 = vmatpush2.bf16.msra.mxu0 0
    %216 = vmatprep.subr.bf16.mxu0 0
    %217 = vmatpush2.bf16.msra.mxu0 0
    %218 = vmatprep.mubr.bf16.mxu0 0
    %219 = vmatmul.mubr.bf16.gmra.mxu0 %v180
    %v220 = vpop.f32.mrf.mxu0
    %v221 = vadd.f32 %v176, %v220
    %v222 = vpop.f32.mrf.mxu0
    %v223 = vpop.f32.mrf.mxu0
    %v224 = vadd.f32 %v176, %v223
    %v225 = vpop.f32.mrf.mxu0
    %226 = vdwg.mxu0
    %v227 = vmax.f32 %v221, 0.0
    %v228 = vmax.f32 %v224, 0.0
    %v229 = vpack.c.bf16 %v228, %v227
    %v231 = vlaneseq
    %v232 = vshrl.u32 %v231, 7
    %v233 = vsub.s32 0, %v232
    %v234 = vrot.slane %v117, %v233
    %v240 = vunpack.c.l.b16 %v113
    %v241 = vunpack.c.l.b16 %v114
    %v242 = vunpack.c.l.b16 %v115
    %v243 = vunpack.c.l.b16 %v116
    %v244 = vpack.c.b16 %v241, %v240
    %v245 = vpack.c.b16 %v243, %v242
    %vm248 = vcmask 261120
    %v250 = vsel %vm248, %v229, 0
    %252 = vmatprep.subr.bf16.mxu0 0
    %253 = vmatpush1.bf16.msra.mxu0 0
    %254 = vmatprep.subr.bf16.mxu0 0
    %255 = vmatpush1.bf16.msra.mxu0 0
    %256 = vmatprep.subr.bf16.mxu0 0
    %257 = vmatpush1.bf16.msra.mxu0 0
    %258 = vmatprep.subr.bf16.mxu0 0
    %259 = vmatpush1.bf16.msra.mxu0 0
    %260 = vmatprep.subr.bf16.mxu0 0
    %261 = vmatpush1.bf16.msra.mxu0 0
    %262 = vmatprep.subr.bf16.mxu0 0
    %263 = vmatpush1.bf16.msra.mxu0 0
    %264 = vmatprep.subr.bf16.mxu0 0
    %265 = vmatpush1.bf16.msra.mxu0 %v245
    %266 = vmatprep.subr.bf16.mxu0 0
    %267 = vmatpush1.bf16.msra.mxu0 %v244
    %268 = vmatprep.subr.bf16.mxu0 0
    %269 = vmatpush2.bf16.msra.mxu0 0
    %270 = vmatprep.subr.bf16.mxu0 0
    %271 = vmatpush2.bf16.msra.mxu0 0
    %272 = vmatprep.subr.bf16.mxu0 0
    %273 = vmatpush2.bf16.msra.mxu0 0
    %274 = vmatprep.subr.bf16.mxu0 0
    %275 = vmatpush2.bf16.msra.mxu0 0
    %276 = vmatprep.subr.bf16.mxu0 0
    %277 = vmatpush2.bf16.msra.mxu0 0
    %278 = vmatprep.subr.bf16.mxu0 0
    %279 = vmatpush2.bf16.msra.mxu0 0
    %280 = vmatprep.subr.bf16.mxu0 0
    %281 = vmatpush2.bf16.msra.mxu0 0
    %282 = vmatprep.subr.bf16.mxu0 0
    %283 = vmatpush2.bf16.msra.mxu0 0
    %284 = vmatprep.mubr.bf16.mxu0 0
    %285 = vmatmul.mubr.bf16.gmra.mxu0 %v250
    %v286 = vpop.f32.mrf.mxu0
    %v287 = vadd.f32 %v234, %v286
    %v288 = vpop.f32.mrf.mxu0
    %v289 = vpop.f32.mrf.mxu0
    %v290 = vadd.f32 %v234, %v289
    %v291 = vpop.f32.mrf.mxu0
    %292 = vdwg.mxu0
    %v293 = vmax.f32 %v287, 0.0
    %v294 = vmax.f32 %v290, 0.0
    %v296 = vsel %vm126, 1.0, 0
    %298 = vmatprep.subr.mxu0 0.0
    %299 = vmatpush1.msra.mxu0 0.0
    %300 = vmatprep.subr.mxu0 0.0
    %301 = vmatpush1.msra.mxu0 0.0
    %302 = vmatprep.subr.mxu0 0.0
    %303 = vmatpush1.msra.mxu0 0.0
    %304 = vmatprep.subr.mxu0 0.0
    %305 = vmatpush1.msra.mxu0 0.0
    %306 = vmatprep.subr.mxu0 0.0
    %307 = vmatpush1.msra.mxu0 0.0
    %308 = vmatprep.subr.mxu0 0.0
    %309 = vmatpush1.msra.mxu0 0.0
    %310 = vmatprep.subr.mxu0 0.0
    %311 = vmatpush1.msra.mxu0 0.0
    %312 = vmatprep.subr.mxu0 0.0
    %313 = vmatpush1.msra.mxu0 0.0
    %314 = vmatprep.subr.mxu0 0.0
    %315 = vmatpush1.msra.mxu0 0.0
    %316 = vmatprep.subr.mxu0 0.0
    %317 = vmatpush1.msra.mxu0 0.0
    %318 = vmatprep.subr.mxu0 0.0
    %319 = vmatpush1.msra.mxu0 0.0
    %320 = vmatprep.subr.mxu0 0.0
    %321 = vmatpush1.msra.mxu0 0.0
    %322 = vmatprep.subr.mxu0 0.0
    %323 = vmatpush1.msra.mxu0 0.0
    %324 = vmatprep.subr.mxu0 0.0
    %325 = vmatpush1.msra.mxu0 0.0
    %326 = vmatprep.subr.mxu0 0.0
    %327 = vmatpush1.msra.mxu0 %v294
    %328 = vmatprep.subr.mxu0 0.0
    %329 = vmatpush1.msra.mxu0 %v293
    %330 = vmatprep.subr.mxu0 0.0
    %331 = vmatpush2.msra.mxu0 0.0
    %332 = vmatprep.subr.mxu0 0.0
    %333 = vmatpush2.msra.mxu0 0.0
    %334 = vmatprep.subr.mxu0 0.0
    %335 = vmatpush2.msra.mxu0 0.0
    %336 = vmatprep.subr.mxu0 0.0
    %337 = vmatpush2.msra.mxu0 0.0
    %338 = vmatprep.subr.mxu0 0.0
    %339 = vmatpush2.msra.mxu0 0.0
    %340 = vmatprep.subr.mxu0 0.0
    %341 = vmatpush2.msra.mxu0 0.0
    %342 = vmatprep.subr.mxu0 0.0
    %343 = vmatpush2.msra.mxu0 0.0
    %344 = vmatprep.subr.mxu0 0.0
    %345 = vmatpush2.msra.mxu0 0.0
    %346 = vmatprep.subr.mxu0 0.0
    %347 = vmatpush2.msra.mxu0 0.0
    %348 = vmatprep.subr.mxu0 0.0
    %349 = vmatpush2.msra.mxu0 0.0
    %350 = vmatprep.subr.mxu0 0.0
    %351 = vmatpush2.msra.mxu0 0.0
    %352 = vmatprep.subr.mxu0 0.0
    %353 = vmatpush2.msra.mxu0 0.0
    %354 = vmatprep.subr.mxu0 0.0
    %355 = vmatpush2.msra.mxu0 0.0
    %356 = vmatprep.subr.mxu0 0.0
    %357 = vmatpush2.msra.mxu0 0.0
    %358 = vmatprep.subr.mxu0 0.0
    %359 = vmatpush2.msra.mxu0 0.0
    %360 = vmatprep.subr.mxu0 0.0
    %361 = vmatpush2.msra.mxu0 0.0
    %362 = vmatprep.mubr.f32.mxu0 0.0
    %363 = vmatmul.mubr.f32.gmra.mxu0 %v296
    %v364 = vpop.f32.mrf.mxu0
    %v365 = vadd.f32 0.0, %v364
    %v366 = vpop.f32.mrf.mxu0
    %367 = vdwg.mxu0
    %v368 = vmul.f32 %v365, 0.0625
    %v369 = vlaneseq
    %v370 = vshrl.u32 %v369, 7
    %v371 = vsub.s32 0, %v370
    %v372 = vrot.slane %v368, %v371
    %v373 = vsub.f32 %v293, %v372
    %v374 = vsub.f32 %v294, %v372
    %v375 = vmul.f32 %v373, %v373
    %v376 = vmul.f32 %v374, %v374
    %377 = vmatprep.subr.mxu0 0.0
    %378 = vmatpush1.msra.mxu0 0.0
    %379 = vmatprep.subr.mxu0 0.0
    %380 = vmatpush1.msra.mxu0 0.0
    %381 = vmatprep.subr.mxu0 0.0
    %382 = vmatpush1.msra.mxu0 0.0
    %383 = vmatprep.subr.mxu0 0.0
    %384 = vmatpush1.msra.mxu0 0.0
    %385 = vmatprep.subr.mxu0 0.0
    %386 = vmatpush1.msra.mxu0 0.0
    %387 = vmatprep.subr.mxu0 0.0
    %388 = vmatpush1.msra.mxu0 0.0
    %389 = vmatprep.subr.mxu0 0.0
    %390 = vmatpush1.msra.mxu0 0.0
    %391 = vmatprep.subr.mxu0 0.0
    %392 = vmatpush1.msra.mxu0 0.0
    %393 = vmatprep.subr.mxu0 0.0
    %394 = vmatpush1.msra.mxu0 0.0
    %395 = vmatprep.subr.mxu0 0.0
    %396 = vmatpush1.msra.mxu0 0.0
    %397 = vmatprep.subr.mxu0 0.0
    %398 = vmatpush1.msra.mxu0 0.0
    %399 = vmatprep.subr.mxu0 0.0
    %400 = vmatpush1.msra.mxu0 0.0
    %401 = vmatprep.subr.mxu0 0.0
    %402 = vmatpush1.msra.mxu0 0.0
    %403 = vmatprep.subr.mxu0 0.0
    %404 = vmatpush1.msra.mxu0 0.0
    %405 = vmatprep.subr.mxu0 0.0
    %406 = vmatpush1.msra.mxu0 %v376
    %407 = vmatprep.subr.mxu0 0.0
    %408 = vmatpush1.msra.mxu0 %v375
    %409 = vmatprep.subr.mxu0 0.0
    %410 = vmatpush2.msra.mxu0 0.0
    %411 = vmatprep.subr.mxu0 0.0
    %412 = vmatpush2.msra.mxu0 0.0
    %413 = vmatprep.subr.mxu0 0.0
    %414 = vmatpush2.msra.mxu0 0.0
    %415 = vmatprep.subr.mxu0 0.0
    %416 = vmatpush2.msra.mxu0 0.0
    %417 = vmatprep.subr.mxu0 0.0
    %418 = vmatpush2.msra.mxu0 0.0
    %419 = vmatprep.subr.mxu0 0.0
    %420 = vmatpush2.msra.mxu0 0.0
    %421 = vmatprep.subr.mxu0 0.0
    %422 = vmatpush2.msra.mxu0 0.0
    %423 = vmatprep.subr.mxu0 0.0
    %424 = vmatpush2.msra.mxu0 0.0
    %425 = vmatprep.subr.mxu0 0.0
    %426 = vmatpush2.msra.mxu0 0.0
    %427 = vmatprep.subr.mxu0 0.0
    %428 = vmatpush2.msra.mxu0 0.0
    %429 = vmatprep.subr.mxu0 0.0
    %430 = vmatpush2.msra.mxu0 0.0
    %431 = vmatprep.subr.mxu0 0.0
    %432 = vmatpush2.msra.mxu0 0.0
    %433 = vmatprep.subr.mxu0 0.0
    %434 = vmatpush2.msra.mxu0 0.0
    %435 = vmatprep.subr.mxu0 0.0
    %436 = vmatpush2.msra.mxu0 0.0
    %437 = vmatprep.subr.mxu0 0.0
    %438 = vmatpush2.msra.mxu0 0.0
    %439 = vmatprep.subr.mxu0 0.0
    %440 = vmatpush2.msra.mxu0 0.0
    %441 = vmatprep.mubr.f32.mxu0 0.0
    %442 = vmatmul.mubr.f32.gmra.mxu0 %v296
    %v443 = vpop.f32.mrf.mxu0
    %v444 = vadd.f32 0.0, %v443
    %v445 = vpop.f32.mrf.mxu0
    %446 = vdwg.mxu0
    %v447 = vmul.f32 %v444, 0.0625
    %v448 = vadd.f32 %v447, 1e-05
    %v449 = vrsqrt.pop %v448
    %v450 = vlaneseq
    %v451 = vshrl.u32 %v450, 7
    %v452 = vsub.s32 0, %v451
    %v453 = vrot.slane %v449, %v452
    %v454 = vmul.f32 %v373, %v453
    %v455 = vmul.f32 %v374, %v453
    %v457 = vlaneseq
    %v458 = vshrl.u32 %v457, 7
    %v459 = vsub.s32 0, %v458
    %v460 = vrot.slane %v118, %v459
    %v462 = vmul.f32 %v454, %v460
    %v463 = vmul.f32 %v455, %v460
    %v465 = vlaneseq
    %v466 = vshrl.u32 %v465, 7
    %v467 = vsub.s32 0, %v466
    %v468 = vrot.slane %v119, %v467
    %v470 = vadd.f32 %v462, %v468
    %v471 = vadd.f32 %v463, %v468
    %v473 = vsel %vm126, %v108, 0
    %475 = vmatprep.subr.mxu0 0.0
    %476 = vmatpush1.msra.mxu0 0.0
    %477 = vmatprep.subr.mxu0 0.0
    %478 = vmatpush1.msra.mxu0 0.0
    %479 = vmatprep.subr.mxu0 0.0
    %480 = vmatpush1.msra.mxu0 0.0
    %481 = vmatprep.subr.mxu0 0.0
    %482 = vmatpush1.msra.mxu0 0.0
    %483 = vmatprep.subr.mxu0 0.0
    %484 = vmatpush1.msra.mxu0 0.0
    %485 = vmatprep.subr.mxu0 0.0
    %486 = vmatpush1.msra.mxu0 0.0
    %487 = vmatprep.subr.mxu0 0.0
    %488 = vmatpush1.msra.mxu0 0.0
    %489 = vmatprep.subr.mxu0 0.0
    %490 = vmatpush1.msra.mxu0 0.0
    %491 = vmatprep.subr.mxu0 0.0
    %492 = vmatpush1.msra.mxu0 0.0
    %493 = vmatprep.subr.mxu0 0.0
    %494 = vmatpush1.msra.mxu0 0.0
    %495 = vmatprep.subr.mxu0 0.0
    %496 = vmatpush1.msra.mxu0 0.0
    %497 = vmatprep.subr.mxu0 0.0
    %498 = vmatpush1.msra.mxu0 0.0
    %499 = vmatprep.subr.mxu0 0.0
    %500 = vmatpush1.msra.mxu0 0.0
    %501 = vmatprep.subr.mxu0 0.0
    %502 = vmatpush1.msra.mxu0 0.0
    %503 = vmatprep.subr.mxu0 0.0
    %504 = vmatpush1.msra.mxu0 %v471
    %505 = vmatprep.subr.mxu0 0.0
    %506 = vmatpush1.msra.mxu0 %v470
    %507 = vmatprep.subr.mxu0 0.0
    %508 = vmatpush2.msra.mxu0 0.0
    %509 = vmatprep.subr.mxu0 0.0
    %510 = vmatpush2.msra.mxu0 0.0
    %511 = vmatprep.subr.mxu0 0.0
    %512 = vmatpush2.msra.mxu0 0.0
    %513 = vmatprep.subr.mxu0 0.0
    %514 = vmatpush2.msra.mxu0 0.0
    %515 = vmatprep.subr.mxu0 0.0
    %516 = vmatpush2.msra.mxu0 0.0
    %517 = vmatprep.subr.mxu0 0.0
    %518 = vmatpush2.msra.mxu0 0.0
    %519 = vmatprep.subr.mxu0 0.0
    %520 = vmatpush2.msra.mxu0 0.0
    %521 = vmatprep.subr.mxu0 0.0
    %522 = vmatpush2.msra.mxu0 0.0
    %523 = vmatprep.subr.mxu0 0.0
    %524 = vmatpush2.msra.mxu0 0.0
    %525 = vmatprep.subr.mxu0 0.0
    %526 = vmatpush2.msra.mxu0 0.0
    %527 = vmatprep.subr.mxu0 0.0
    %528 = vmatpush2.msra.mxu0 0.0
    %529 = vmatprep.subr.mxu0 0.0
    %530 = vmatpush2.msra.mxu0 0.0
    %531 = vmatprep.subr.mxu0 0.0
    %532 = vmatpush2.msra.mxu0 0.0
    %533 = vmatprep.subr.mxu0 0.0
    %534 = vmatpush2.msra.mxu0 0.0
    %535 = vmatprep.subr.mxu0 0.0
    %536 = vmatpush2.msra.mxu0 0.0
    %537 = vmatprep.subr.mxu0 0.0
    %538 = vmatpush2.msra.mxu0 0.0
    %539 = vmatprep.mubr.f32.mxu0 0.0
    %540 = vmatmul.mubr.f32.gmra.mxu0 %v473
    %v541 = vpop.f32.mrf.mxu0
    %v542 = vadd.f32 0.0, %v541
    %v543 = vpop.f32.mrf.mxu0
    %544 = vdwg.mxu0
    %v545 = vld [vmem:[%s9] sm:$0xf]
    %v546 = vld [vmem:[%s9 + $0x4] sm:$0xf]
    %v547 = vld [vmem:[%s9 + $0x8] sm:$0xf]
    %v548 = vld [vmem:[%s9 + $0xc] sm:$0xf]
    %v549 = vld [vmem:[%s10] sm:$0x1]
    %v550 = vld [vmem:[#allocation8] sm:$0xf]
    %v551 = vld [vmem:[#allocation8 + $0x4] sm:$0xf]
    %v552 = vld [vmem:[#allocation8 + $0x8] sm:$0xf]
    %v553 = vld [vmem:[#allocation8 + $0xc] sm:$0xf]
    %v554 = vld [vmem:[%s12] sm:$0x1]
    %v555 = vld [vmem:[%s13] sm:$0x1]
    %v556 = vld [vmem:[%s14] sm:$0x1]
    %v557 = vpack.c.bf16 %v471, %v470
    %558 = vmatprep.subr.bf16.mxu0 0
    %559 = vmatpush1.bf16.msra.mxu0 0
    %560 = vmatprep.subr.bf16.mxu0 0
    %561 = vmatpush1.bf16.msra.mxu0 0
    %562 = vmatprep.subr.bf16.mxu0 0
    %563 = vmatpush1.bf16.msra.mxu0 0
    %564 = vmatprep.subr.bf16.mxu0 0
    %565 = vmatpush1.bf16.msra.mxu0 0
    %566 = vmatprep.subr.bf16.mxu0 0
    %567 = vmatpush1.bf16.msra.mxu0 0
    %568 = vmatprep.subr.bf16.mxu0 0
    %569 = vmatpush1.bf16.msra.mxu0 0
    %570 = vmatprep.subr.bf16.mxu0 0
    %571 = vmatpush1.bf16.msra.mxu0 0
    %572 = vmatprep.subr.bf16.mxu0 0
    %573 = vmatpush1.bf16.msra.mxu0 %v557
    %574 = vmatprep.subr.bf16.mxu0 0
    %575 = vmatpush2.bf16.msra.mxu0 0
    %576 = vmatprep.subr.bf16.mxu0 0
    %577 = vmatpush2.bf16.msra.mxu0 0
    %578 = vmatprep.subr.bf16.mxu0 0
    %579 = vmatpush2.bf16.msra.mxu0 0
    %580 = vmatprep.subr.bf16.mxu0 0
    %581 = vmatpush2.bf16.msra.mxu0 0
    %582 = vmatprep.subr.bf16.mxu0 0
    %583 = vmatpush2.bf16.msra.mxu0 0
    %584 = vmatprep.subr.bf16.mxu0 0
    %585 = vmatpush2.bf16.msra.mxu0 0
    %586 = vmatprep.subr.bf16.mxu0 0
    %587 = vmatpush2.bf16.msra.mxu0 0
    %588 = vmatprep.subr.bf16.mxu0 0
    %589 = vmatpush2.bf16.msra.mxu0 0
    %590 = vmatprep.mubr.bf16.mxu0 0
    %591 = vmatmul.mubr.bf16.gmra.mxu0 %v128
    %v592 = vpop.f32.mrf.mxu0
    %v593 = vadd.f32 0.0, %v592
    %v594 = vpop.f32.mrf.mxu0
    %v595 = vpop.f32.mrf.mxu0
    %v596 = vadd.f32 0.0, %v595
    %v597 = vpop.f32.mrf.mxu0
    %598 = vdwg.mxu0
    %v599 = vpack.c.bf16 %v596, %v593
    %v601 = vlaneseq
    %v602 = vshrl.u32 %v601, 7
    %v603 = vsub.s32 0, %v602
    %v604 = vrot.slane %v549, %v603
    %v610 = vunpack.c.l.b16 %v545
    %v611 = vunpack.c.l.b16 %v546
    %v612 = vunpack.c.l.b16 %v547
    %v613 = vunpack.c.l.b16 %v548
    %v614 = vpack.c.b16 %v611, %v610
    %v615 = vpack.c.b16 %v613, %v612
    %v619 = vsel %vm248, %v599, 0
    %621 = vmatprep.subr.bf16.mxu0 0
    %622 = vmatpush1.bf16.msra.mxu0 0
    %623 = vmatprep.subr.bf16.mxu0 0
    %624 = vmatpush1.bf16.msra.mxu0 0
    %625 = vmatprep.subr.bf16.mxu0 0
    %626 = vmatpush1.bf16.msra.mxu0 0
    %627 = vmatprep.subr.bf16.mxu0 0
    %628 = vmatpush1.bf16.msra.mxu0 0
    %629 = vmatprep.subr.bf16.mxu0 0
    %630 = vmatpush1.bf16.msra.mxu0 0
    %631 = vmatprep.subr.bf16.mxu0 0
    %632 = vmatpush1.bf16.msra.mxu0 0
    %633 = vmatprep.subr.bf16.mxu0 0
    %634 = vmatpush1.bf16.msra.mxu0 %v615
    %635 = vmatprep.subr.bf16.mxu0 0
    %636 = vmatpush1.bf16.msra.mxu0 %v614
    %637 = vmatprep.subr.bf16.mxu0 0
    %638 = vmatpush2.bf16.msra.mxu0 0
    %639 = vmatprep.subr.bf16.mxu0 0
    %640 = vmatpush2.bf16.msra.mxu0 0
    %641 = vmatprep.subr.bf16.mxu0 0
    %642 = vmatpush2.bf16.msra.mxu0 0
    %643 = vmatprep.subr.bf16.mxu0 0
    %644 = vmatpush2.bf16.msra.mxu0 0
    %645 = vmatprep.subr.bf16.mxu0 0
    %646 = vmatpush2.bf16.msra.mxu0 0
    %647 = vmatprep.subr.bf16.mxu0 0
    %648 = vmatpush2.bf16.msra.mxu0 0
    %649 = vmatprep.subr.bf16.mxu0 0
    %650 = vmatpush2.bf16.msra.mxu0 0
    %651 = vmatprep.subr.bf16.mxu0 0
    %652 = vmatpush2.bf16.msra.mxu0 0
    %653 = vmatprep.mubr.bf16.mxu0 0
    %654 = vmatmul.mubr.bf16.gmra.mxu0 %v619
    %v655 = vpop.f32.mrf.mxu0
    %v656 = vadd.f32 %v604, %v655
    %v657 = vpop.f32.mrf.mxu0
    %v658 = vpop.f32.mrf.mxu0
    %v659 = vadd.f32 %v604, %v658
    %v660 = vpop.f32.mrf.mxu0
    %661 = vdwg.mxu0
    %v662 = vmax.f32 %v656, 0.0
    %v663 = vmax.f32 %v659, 0.0
    %v664 = vpack.c.bf16 %v663, %v662
    %v666 = vlaneseq
    %v667 = vshrl.u32 %v666, 7
    %v668 = vsub.s32 0, %v667
    %v669 = vrot.slane %v554, %v668
    %v675 = vunpack.c.l.b16 %v550
    %v676 = vunpack.c.l.b16 %v551
    %v677 = vunpack.c.l.b16 %v552
    %v678 = vunpack.c.l.b16 %v553
    %v679 = vpack.c.b16 %v676, %v675
    %v680 = vpack.c.b16 %v678, %v677
    %v684 = vsel %vm248, %v664, 0
    %686 = vmatprep.subr.bf16.mxu0 0
    %687 = vmatpush1.bf16.msra.mxu0 0
    %688 = vmatprep.subr.bf16.mxu0 0
    %689 = vmatpush1.bf16.msra.mxu0 0
    %690 = vmatprep.subr.bf16.mxu0 0
    %691 = vmatpush1.bf16.msra.mxu0 0
    %692 = vmatprep.subr.bf16.mxu0 0
    %693 = vmatpush1.bf16.msra.mxu0 0
    %694 = vmatprep.subr.bf16.mxu0 0
    %695 = vmatpush1.bf16.msra.mxu0 0
    %696 = vmatprep.subr.bf16.mxu0 0
    %697 = vmatpush1.bf16.msra.mxu0 0
    %698 = vmatprep.subr.bf16.mxu0 0
    %699 = vmatpush1.bf16.msra.mxu0 %v680
    %700 = vmatprep.subr.bf16.mxu0 0
    %701 = vmatpush1.bf16.msra.mxu0 %v679
    %702 = vmatprep.subr.bf16.mxu0 0
    %703 = vmatpush2.bf16.msra.mxu0 0
    %704 = vmatprep.subr.bf16.mxu0 0
    %705 = vmatpush2.bf16.msra.mxu0 0
    %706 = vmatprep.subr.bf16.mxu0 0
    %707 = vmatpush2.bf16.msra.mxu0 0
    %708 = vmatprep.subr.bf16.mxu0 0
    %709 = vmatpush2.bf16.msra.mxu0 0
    %710 = vmatprep.subr.bf16.mxu0 0
    %711 = vmatpush2.bf16.msra.mxu0 0
    %712 = vmatprep.subr.bf16.mxu0 0
    %713 = vmatpush2.bf16.msra.mxu0 0
    %714 = vmatprep.subr.bf16.mxu0 0
    %715 = vmatpush2.bf16.msra.mxu0 0
    %716 = vmatprep.subr.bf16.mxu0 0
    %717 = vmatpush2.bf16.msra.mxu0 0
    %718 = vmatprep.mubr.bf16.mxu0 0
    %719 = vmatmul.mubr.bf16.gmra.mxu0 %v684
    %v720 = vpop.f32.mrf.mxu0
    %v721 = vadd.f32 %v669, %v720
    %v722 = vpop.f32.mrf.mxu0
    %v723 = vpop.f32.mrf.mxu0
    %v724 = vadd.f32 %v669, %v723
    %v725 = vpop.f32.mrf.mxu0
    %726 = vdwg.mxu0
    %v727 = vmax.f32 %v721, 0.0
    %v728 = vmax.f32 %v724, 0.0
    %729 = vmatprep.subr.mxu0 0.0
    %730 = vmatpush1.msra.mxu0 0.0
    %731 = vmatprep.subr.mxu0 0.0
    %732 = vmatpush1.msra.mxu0 0.0
    %733 = vmatprep.subr.mxu0 0.0
    %734 = vmatpush1.msra.mxu0 0.0
    %735 = vmatprep.subr.mxu0 0.0
    %736 = vmatpush1.msra.mxu0 0.0
    %737 = vmatprep.subr.mxu0 0.0
    %738 = vmatpush1.msra.mxu0 0.0
    %739 = vmatprep.subr.mxu0 0.0
    %740 = vmatpush1.msra.mxu0 0.0
    %741 = vmatprep.subr.mxu0 0.0
    %742 = vmatpush1.msra.mxu0 0.0
    %743 = vmatprep.subr.mxu0 0.0
    %744 = vmatpush1.msra.mxu0 0.0
    %745 = vmatprep.subr.mxu0 0.0
    %746 = vmatpush1.msra.mxu0 0.0
    %747 = vmatprep.subr.mxu0 0.0
    %748 = vmatpush1.msra.mxu0 0.0
    %749 = vmatprep.subr.mxu0 0.0
    %750 = vmatpush1.msra.mxu0 0.0
    %751 = vmatprep.subr.mxu0 0.0
    %752 = vmatpush1.msra.mxu0 0.0
    %753 = vmatprep.subr.mxu0 0.0
    %754 = vmatpush1.msra.mxu0 0.0
    %755 = vmatprep.subr.mxu0 0.0
    %756 = vmatpush1.msra.mxu0 0.0
    %757 = vmatprep.subr.mxu0 0.0
    %758 = vmatpush1.msra.mxu0 %v728
    %759 = vmatprep.subr.mxu0 0.0
    %760 = vmatpush1.msra.mxu0 %v727
    %761 = vmatprep.subr.mxu0 0.0
    %762 = vmatpush2.msra.mxu0 0.0
    %763 = vmatprep.subr.mxu0 0.0
    %764 = vmatpush2.msra.mxu0 0.0
    %765 = vmatprep.subr.mxu0 0.0
    %766 = vmatpush2.msra.mxu0 0.0
    %767 = vmatprep.subr.mxu0 0.0
    %768 = vmatpush2.msra.mxu0 0.0
    %769 = vmatprep.subr.mxu0 0.0
    %770 = vmatpush2.msra.mxu0 0.0
    %771 = vmatprep.subr.mxu0 0.0
    %772 = vmatpush2.msra.mxu0 0.0
    %773 = vmatprep.subr.mxu0 0.0
    %774 = vmatpush2.msra.mxu0 0.0
    %775 = vmatprep.subr.mxu0 0.0
    %776 = vmatpush2.msra.mxu0 0.0
    %777 = vmatprep.subr.mxu0 0.0
    %778 = vmatpush2.msra.mxu0 0.0
    %779 = vmatprep.subr.mxu0 0.0
    %780 = vmatpush2.msra.mxu0 0.0
    %781 = vmatprep.subr.mxu0 0.0
    %782 = vmatpush2.msra.mxu0 0.0
    %783 = vmatprep.subr.mxu0 0.0
    %784 = vmatpush2.msra.mxu0 0.0
    %785 = vmatprep.subr.mxu0 0.0
    %786 = vmatpush2.msra.mxu0 0.0
    %787 = vmatprep.subr.mxu0 0.0
    %788 = vmatpush2.msra.mxu0 0.0
    %789 = vmatprep.subr.mxu0 0.0
    %790 = vmatpush2.msra.mxu0 0.0
    %791 = vmatprep.subr.mxu0 0.0
    %792 = vmatpush2.msra.mxu0 0.0
    %793 = vmatprep.mubr.f32.mxu0 0.0
    %794 = vmatmul.mubr.f32.gmra.mxu0 %v296
    %v795 = vpop.f32.mrf.mxu0
    %v796 = vadd.f32 0.0, %v795
    %v797 = vpop.f32.mrf.mxu0
    %798 = vdwg.mxu0
    %v799 = vmul.f32 %v796, 0.0625
    %v800 = vlaneseq
    %v801 = vshrl.u32 %v800, 7
    %v802 = vsub.s32 0, %v801
    %v803 = vrot.slane %v799, %v802
    %v804 = vsub.f32 %v727, %v803
    %v805 = vsub.f32 %v728, %v803
    %v806 = vmul.f32 %v804, %v804
    %v807 = vmul.f32 %v805, %v805
    %808 = vmatprep.subr.mxu0 0.0
    %809 = vmatpush1.msra.mxu0 0.0
    %810 = vmatprep.subr.mxu0 0.0
    %811 = vmatpush1.msra.mxu0 0.0
    %812 = vmatprep.subr.mxu0 0.0
    %813 = vmatpush1.msra.mxu0 0.0
    %814 = vmatprep.subr.mxu0 0.0
    %815 = vmatpush1.msra.mxu0 0.0
    %816 = vmatprep.subr.mxu0 0.0
    %817 = vmatpush1.msra.mxu0 0.0
    %818 = vmatprep.subr.mxu0 0.0
    %819 = vmatpush1.msra.mxu0 0.0
    %820 = vmatprep.subr.mxu0 0.0
    %821 = vmatpush1.msra.mxu0 0.0
    %822 = vmatprep.subr.mxu0 0.0
    %823 = vmatpush1.msra.mxu0 0.0
    %824 = vmatprep.subr.mxu0 0.0
    %825 = vmatpush1.msra.mxu0 0.0
    %826 = vmatprep.subr.mxu0 0.0
    %827 = vmatpush1.msra.mxu0 0.0
    %828 = vmatprep.subr.mxu0 0.0
    %829 = vmatpush1.msra.mxu0 0.0
    %830 = vmatprep.subr.mxu0 0.0
    %831 = vmatpush1.msra.mxu0 0.0
    %832 = vmatprep.subr.mxu0 0.0
    %833 = vmatpush1.msra.mxu0 0.0
    %834 = vmatprep.subr.mxu0 0.0
    %835 = vmatpush1.msra.mxu0 0.0
    %836 = vmatprep.subr.mxu0 0.0
    %837 = vmatpush1.msra.mxu0 %v807
    %838 = vmatprep.subr.mxu0 0.0
    %839 = vmatpush1.msra.mxu0 %v806
    %840 = vmatprep.subr.mxu0 0.0
    %841 = vmatpush2.msra.mxu0 0.0
    %842 = vmatprep.subr.mxu0 0.0
    %843 = vmatpush2.msra.mxu0 0.0
    %844 = vmatprep.subr.mxu0 0.0
    %845 = vmatpush2.msra.mxu0 0.0
    %846 = vmatprep.subr.mxu0 0.0
    %847 = vmatpush2.msra.mxu0 0.0
    %848 = vmatprep.subr.mxu0 0.0
    %849 = vmatpush2.msra.mxu0 0.0
    %850 = vmatprep.subr.mxu0 0.0
    %851 = vmatpush2.msra.mxu0 0.0
    %852 = vmatprep.subr.mxu0 0.0
    %853 = vmatpush2.msra.mxu0 0.0
    %854 = vmatprep.subr.mxu0 0.0
    %855 = vmatpush2.msra.mxu0 0.0
    %856 = vmatprep.subr.mxu0 0.0
    %857 = vmatpush2.msra.mxu0 0.0
    %858 = vmatprep.subr.mxu0 0.0
    %859 = vmatpush2.msra.mxu0 0.0
    %860 = vmatprep.subr.mxu0 0.0
    %861 = vmatpush2.msra.mxu0 0.0
    %862 = vmatprep.subr.mxu0 0.0
    %863 = vmatpush2.msra.mxu0 0.0
    %864 = vmatprep.subr.mxu0 0.0
    %865 = vmatpush2.msra.mxu0 0.0
    %866 = vmatprep.subr.mxu0 0.0
    %867 = vmatpush2.msra.mxu0 0.0
    %868 = vmatprep.subr.mxu0 0.0
    %869 = vmatpush2.msra.mxu0 0.0
    %870 = vmatprep.subr.mxu0 0.0
    %871 = vmatpush2.msra.mxu0 0.0
    %872 = vmatprep.mubr.f32.mxu0 0.0
    %873 = vmatmul.mubr.f32.gmra.mxu0 %v296
    %v874 = vpop.f32.mrf.mxu0
    %v875 = vadd.f32 0.0, %v874
    %v876 = vpop.f32.mrf.mxu0
    %877 = vdwg.mxu0
    %v878 = vmul.f32 %v875, 0.0625
    %v879 = vadd.f32 %v878, 1e-05
    %v880 = vrsqrt.pop %v879
    %v881 = vlaneseq
    %v882 = vshrl.u32 %v881, 7
    %v883 = vsub.s32 0, %v882
    %v884 = vrot.slane %v880, %v883
    %v885 = vmul.f32 %v804, %v884
    %v886 = vmul.f32 %v805, %v884
    %v888 = vlaneseq
    %v889 = vshrl.u32 %v888, 7
    %v890 = vsub.s32 0, %v889
    %v891 = vrot.slane %v555, %v890
    %v893 = vmul.f32 %v885, %v891
    %v894 = vmul.f32 %v886, %v891
    %v896 = vlaneseq
    %v897 = vshrl.u32 %v896, 7
    %v898 = vsub.s32 0, %v897
    %v899 = vrot.slane %v556, %v898
    %v901 = vadd.f32 %v893, %v899
    %v902 = vadd.f32 %v894, %v899
    %903 = vmatprep.subr.mxu0 0.0
    %904 = vmatpush1.msra.mxu0 0.0
    %905 = vmatprep.subr.mxu0 0.0
    %906 = vmatpush1.msra.mxu0 0.0
    %907 = vmatprep.subr.mxu0 0.0
    %908 = vmatpush1.msra.mxu0 0.0
    %909 = vmatprep.subr.mxu0 0.0
    %910 = vmatpush1.msra.mxu0 0.0
    %911 = vmatprep.subr.mxu0 0.0
    %912 = vmatpush1.msra.mxu0 0.0
    %913 = vmatprep.subr.mxu0 0.0
    %914 = vmatpush1.msra.mxu0 0.0
    %915 = vmatprep.subr.mxu0 0.0
    %916 = vmatpush1.msra.mxu0 0.0
    %917 = vmatprep.subr.mxu0 0.0
    %918 = vmatpush1.msra.mxu0 0.0
    %919 = vmatprep.subr.mxu0 0.0
    %920 = vmatpush1.msra.mxu0 0.0
    %921 = vmatprep.subr.mxu0 0.0
    %922 = vmatpush1.msra.mxu0 0.0
    %923 = vmatprep.subr.mxu0 0.0
    %924 = vmatpush1.msra.mxu0 0.0
    %925 = vmatprep.subr.mxu0 0.0
    %926 = vmatpush1.msra.mxu0 0.0
    %927 = vmatprep.subr.mxu0 0.0
    %928 = vmatpush1.msra.mxu0 0.0
    %929 = vmatprep.subr.mxu0 0.0
    %930 = vmatpush1.msra.mxu0 0.0
    %931 = vmatprep.subr.mxu0 0.0
    %932 = vmatpush1.msra.mxu0 %v902
    %933 = vmatprep.subr.mxu0 0.0
    %934 = vmatpush1.msra.mxu0 %v901
    %935 = vmatprep.subr.mxu0 0.0
    %936 = vmatpush2.msra.mxu0 0.0
    %937 = vmatprep.subr.mxu0 0.0
    %938 = vmatpush2.msra.mxu0 0.0
    %939 = vmatprep.subr.mxu0 0.0
    %940 = vmatpush2.msra.mxu0 0.0
    %941 = vmatprep.subr.mxu0 0.0
    %942 = vmatpush2.msra.mxu0 0.0
    %943 = vmatprep.subr.mxu0 0.0
    %944 = vmatpush2.msra.mxu0 0.0
    %945 = vmatprep.subr.mxu0 0.0
    %946 = vmatpush2.msra.mxu0 0.0
    %947 = vmatprep.subr.mxu0 0.0
    %948 = vmatpush2.msra.mxu0 0.0
    %949 = vmatprep.subr.mxu0 0.0
    %950 = vmatpush2.msra.mxu0 0.0
    %951 = vmatprep.subr.mxu0 0.0
    %952 = vmatpush2.msra.mxu0 0.0
    %953 = vmatprep.subr.mxu0 0.0
    %954 = vmatpush2.msra.mxu0 0.0
    %955 = vmatprep.subr.mxu0 0.0
    %956 = vmatpush2.msra.mxu0 0.0
    %957 = vmatprep.subr.mxu0 0.0
    %958 = vmatpush2.msra.mxu0 0.0
    %959 = vmatprep.subr.mxu0 0.0
    %960 = vmatpush2.msra.mxu0 0.0
    %961 = vmatprep.subr.mxu0 0.0
    %962 = vmatpush2.msra.mxu0 0.0
    %963 = vmatprep.subr.mxu0 0.0
    %964 = vmatpush2.msra.mxu0 0.0
    %965 = vmatprep.subr.mxu0 0.0
    %966 = vmatpush2.msra.mxu0 0.0
    %967 = vmatprep.mubr.f32.mxu0 0.0
    %968 = vmatmul.mubr.f32.gmra.mxu0 %v473
    %v969 = vpop.f32.mrf.mxu0
    %v970 = vadd.f32 0.0, %v969
    %v971 = vpop.f32.mrf.mxu0
    %972 = vdwg.mxu0
    %975 = vrot.lane.b32.xlu0 %v901, 32
    %v976 = vpop.permute.xlu0 %975
    %977 = vrot.lane.b32.xlu0 %v902, 32
    %v978 = vpop.permute.xlu0 %977
    %v981 = vsel %vm248, %v470, %v976
    %v982 = vsel %vm248, %v471, %v978
    %vm983 = vcmask 523264
    %984 = vst.msk [vmem:[#allocation10] sm:$0xff] %vm983, %v981
    %985 = vst.msk [vmem:[#allocation10 + $0x8] sm:$0xff] %vm983, %v982
    %987 = vrot.lane.b32.xlu0 %v970, 32
    %v988 = vpop.permute.xlu0 %987
    %v990 = vsel %vm248, %v542, %v988
    %vm991 = vcmask 517120
    %992 = vst.msk [vmem:[#allocation11] sm:$0x3] %vm991, %v990
    // Predicated region
    $region78: #{tpu_custom_call.1} parent=1 // pred_check
      _
    $region79: #{tpu_custom_call.1} parent=1 // pred_check_branch
      %994 = sbr.rel (0) target = $region81
    $region80: #{tpu_custom_call.1} parent=1 // pred_region
      %s996 = ssub.s32 256, 256
      %997 = vsyncadd [#allocation4], %s996
      %s998 = sshll.u32 [#allocation10], 4
      %s999 = int_to_ptr.vmem [resolvable:$true] %s998
      %1004 = dma.vmem_to_hbm [thread:$0]  %s999, 256, %s15, [#allocation4], 128, 128, 8
    $region81: #{tpu_custom_call.1} parent=1 // pred_fallthru
      _
    // Predicated region
    $region82: #{tpu_custom_call.1} parent=1 // pred_check
      _
    $region83: #{tpu_custom_call.1} parent=1 // pred_check_branch
      %1006 = sbr.rel (0) target = $region85
    $region84: #{tpu_custom_call.1} parent=1 // pred_region
      %s1008 = ssub.s32 32, 32
      %1009 = vsyncadd [#allocation12], %s1008
      %s1011 = sshll.u32 [#allocation11], 4
      %s1012 = int_to_ptr.vmem [resolvable:$true] %s1011
      %1014 = dma.vmem_to_hbm [thread:$0]  %s1012, 32, %s16, [#allocation12]
    $region85: #{tpu_custom_call.1} parent=1 // pred_fallthru
      _
    // Predicated region
    $region86: #{tpu_custom_call.1} parent=1 // pred_check
      _
    $region87: #{tpu_custom_call.1} parent=1 // pred_check_branch
      %1016 = sbr.rel (0) target = $region89
    $region88: #{tpu_custom_call.1} parent=1 // pred_region
      %1017 = dma.done [#allocation4], 256
    $region89: #{tpu_custom_call.1} parent=1 // pred_fallthru
      _
    // Predicated region
    $region90: #{tpu_custom_call.1} parent=1 // pred_check
      _
    $region91: #{tpu_custom_call.1} parent=1 // pred_check_branch
      %1019 = sbr.rel (0) target = $region93
    $region92: #{tpu_custom_call.1} parent=1 // pred_region
      %1020 = dma.done [#allocation12], 32
    $region93: #{tpu_custom_call.1} parent=1 // pred_fallthru
      _
    %1021 = vsyncpa [#allocation3], 1
    %1022 = vsyncpa [#allocation6], 1
    %1023 = vsyncpa [#allocation9], 1
    %1024 = vsyncpa [#allocation4], 1
    %1025 = vsyncpa [#allocation12], 1

</llo_original>
